<compile_context>
chip_gen: v7x
topology: tpu7x:2x2x1
jax: 0.10.0
libtpu: 0.0.40
codegen_flags: <defaults>
</compile_context>

<pallas_src>
import numpy as np
import jax
import jax.numpy as jnp
from jax import lax
from jax.experimental import pallas as pl
from jax.experimental.pallas import tpu as pltpu

HID_LAYER1 = 40
HID_LAYER2 = 40
WFINAL = 0.003
BN_EPS = 1e-5

LANE = 128      # TPU lane width: the packed table is lane-dense (width 128)
SUBLANE = 8     # f32 sublane height: every parameter block starts 8-row aligned

# Nine 1-row vectors grouped into one contiguous, 8-aligned header block.
_HEADER_ROWS = {
    "gamma0": 0, "beta0": 1, "b1": 2, "gamma1": 3, "beta1": 4,
    "b2": 5, "gamma2": 6, "beta2": 7, "b3": 8,
}


def _round_up(n, m):
    return (n + m - 1) // m * m


def _param_layout(state_dim):
    """8-row-aligned row offsets of each block inside the packed (R, 128) table."""
    header_rows = _round_up(len(_HEADER_ROWS), SUBLANE)          # 16
    w1_rows = _round_up(state_dim, SUBLANE)
    off = {
        "header": 0,
        "w1": header_rows,                                       # (S, 128)
        "w2": header_rows + w1_rows,                             # (128, 128)
        "w3": header_rows + w1_rows + LANE,                      # (128, 128)
    }
    total_rows = header_rows + w1_rows + 2 * LANE
    return off, total_rows


def pack_actor_params(params, state_dim, action_dim):
    """Pack all parameters into one 8-aligned, 128-lane (R, 128) f32 table."""
    off, total_rows = _param_layout(state_dim)
    table = jnp.zeros((total_rows, LANE), jnp.float32)

    def put_row(t, row, v):
        v = jnp.asarray(v, jnp.float32).reshape(-1)
        return t.at[row, : v.shape[0]].set(v)

    def put_mat(t, row, m):
        m = jnp.asarray(m, jnp.float32)
        return t.at[row:row + m.shape[0], : m.shape[1]].set(m)

    for name, r in _HEADER_ROWS.items():
        table = put_row(table, off["header"] + r, params[name])
    table = put_mat(table, off["w1"], params["w1"])   # (S,  H1) zero-padded to (S, 128)
    table = put_mat(table, off["w2"], params["w2"])   # (H1, H2) zero-padded to (128, 128)
    table = put_mat(table, off["w3"], params["w3"])   # (H2, A)  zero-padded to (128, 128)
    return table


def actor_forward(x, packed_params, state_dim, action_dim):
    """x: (B, stateDim) f32 -> action probs: (B, actionDim) f32."""
    B = x.shape[0]
    S, H1, H2, A = state_dim, HID_LAYER1, HID_LAYER2, action_dim
    off, total_rows = _param_layout(S)
    assert packed_params.shape == (total_rows, LANE)
    hdr = off["header"]

    def batchnorm(h, gamma, beta):
        # Training-mode BatchNorm1d; one-pass variance with clamp (review fix).
        mean = jnp.mean(h, axis=0, keepdims=True)
        var = jnp.maximum(jnp.mean(h * h, axis=0, keepdims=True) - mean * mean, 0.0)
        return (h - mean) * lax.rsqrt(var + BN_EPS) * gamma + beta

    def kernel(x_ref, p_ref, out_ref):
        x_in = x_ref[...]                                          # (B, S)

        def row(name, ncols=LANE):
            r = hdr + _HEADER_ROWS[name]                           # static offsets only
            return p_ref[r:r + 1, 0:ncols]

        gamma0, beta0 = row("gamma0", S), row("beta0", S)
        b1, gamma1, beta1 = row("b1"), row("gamma1"), row("beta1")   # lane-dense (1,128)
        b2, gamma2, beta2 = row("b2"), row("gamma2"), row("beta2")
        b3 = row("b3", A)

        # 8-row-aligned, whole-lane weight views (zero-padded lanes/rows).
        w1 = p_ref[off["w1"]:off["w1"] + S, :]                     # (S, 128)
        w2 = p_ref[off["w2"]:off["w2"] + LANE, :]                  # (128, 128)
        w3 = p_ref[off["w3"]:off["w3"] + LANE, :]                  # (128, 128)

        ip_norm = batchnorm(x_in, gamma0, beta0)                   # (B, S)

        # Lane-dense matmuls; padded lanes are exactly 0 through ReLU and BN.
        h1 = jnp.maximum(
            jnp.dot(ip_norm, w1, preferred_element_type=jnp.float32) + b1, 0.0)   # (B,128)
        h1_norm = batchnorm(h1, gamma1, beta1)
        h2 = jnp.maximum(
            jnp.dot(h1_norm, w2, preferred_element_type=jnp.float32) + b2, 0.0)   # (B,128)
        h2_norm = batchnorm(h2, gamma2, beta2)

        # Slice back to the true action width BEFORE softmax (padded lanes must
        # not enter the normalization).
        logits = jnp.dot(h2_norm, w3,
                         preferred_element_type=jnp.float32)[:, 0:A] + b3         # (B, A)

        m = jnp.max(logits, axis=1, keepdims=True)
        e = jnp.exp(logits - m)
        inv = pl.reciprocal(jnp.sum(e, axis=1, keepdims=True), approx=False)  # EUP slot
        out_ref[...] = (e * inv).astype(out_ref.dtype)

    flops = 2 * B * (S * H1 + H1 * H2 + H2 * A) + 12 * B * (S + H1 + H2) + 6 * B * A
    transcendentals = (S + H1 + H2) + B * A
    bytes_accessed = 4 * (x.size + packed_params.size + B * A)

    vmem = pl.BlockSpec(memory_space=pltpu.MemorySpace.VMEM)
    return pl.pallas_call(
        kernel,
        out_shape=jax.ShapeDtypeStruct((B, A), jnp.float32),
        in_specs=[vmem, vmem],
        out_specs=vmem,
        cost_estimate=pl.CostEstimate(flops=int(flops),
                                      transcendentals=int(transcendentals),
                                      bytes_accessed=int(bytes_accessed)),
    )(x, packed_params)


def fanin_init(key, shape, fanin):
    """Mirror of the torch fanin_init: U(-1/sqrt(fanin), 1/sqrt(fanin))."""
    w = 1.0 / np.sqrt(fanin)
    return jax.random.uniform(key, shape, jnp.float32, minval=-w, maxval=w)


def init_actor_params(key, state_dim, action_dim):
    S, H1, H2, A = state_dim, HID_LAYER1, HID_LAYER2, action_dim
    ks = jax.random.split(key, 6)
    return {
        # BatchNorm affine params (default gamma=1, beta=0)
        "gamma0": jnp.ones((1, S), jnp.float32), "beta0": jnp.zeros((1, S), jnp.float32),
        "gamma1": jnp.ones((1, H1), jnp.float32), "beta1": jnp.zeros((1, H1), jnp.float32),
        "gamma2": jnp.ones((1, H2), jnp.float32), "beta2": jnp.zeros((1, H2), jnp.float32),
        # fc1: torch weight (H1, S) fanin_init(fanin=H1); stored transposed (S, H1)
        "w1": fanin_init(ks[0], (S, H1), fanin=H1),
        "b1": fanin_init(ks[1], (1, H1), fanin=S),
        # fc2: torch weight (H2, H1) fanin_init(fanin=H2); stored transposed (H1, H2)
        "w2": fanin_init(ks[2], (H1, H2), fanin=H2),
        "b2": fanin_init(ks[3], (1, H2), fanin=H1),
        # fc3: weight U(-WFINAL, WFINAL); bias keeps torch default Linear init
        "w3": jax.random.uniform(ks[4], (H2, A), jnp.float32,
                                 minval=-WFINAL, maxval=WFINAL),
        "b3": fanin_init(ks[5], (1, A), fanin=H2),
    }


def actor_reference(x, p):
    """Pure-JAX reference (centered-variance BN, jax.nn.softmax) for checking."""
    def bn(h, g, b):
        mean = jnp.mean(h, axis=0, keepdims=True)
        var = jnp.mean((h - mean) ** 2, axis=0, keepdims=True)
        return (h - mean) / jnp.sqrt(var + BN_EPS) * g + b

    xn = bn(x, p["gamma0"], p["beta0"])
    h1 = jnp.maximum(xn @ p["w1"] + p["b1"], 0.0)
    h1n = bn(h1, p["gamma1"], p["beta1"])
    h2 = jnp.maximum(h1n @ p["w2"] + p["b2"], 0.0)
    h2n = bn(h2, p["gamma2"], p["beta2"])
    return jax.nn.softmax(h2n @ p["w3"] + p["b3"], axis=1)


if __name__ == "__main__":
    B, STATE_DIM, ACTION_DIM = 8, 16, 4

    key = jax.random.PRNGKey(0)
    k_x, k_p = jax.random.split(key)
    x = jax.random.normal(k_x, (B, STATE_DIM), jnp.float32)
    params = init_actor_params(k_p, STATE_DIM, ACTION_DIM)
    packed = pack_actor_params(params, STATE_DIM, ACTION_DIM)

    action = actor_forward(x, packed, STATE_DIM, ACTION_DIM)
    action = jax.block_until_ready(action)

    action_ref = actor_reference(x, params)
    np.testing.assert_allclose(np.asarray(action), np.asarray(action_ref),
                               rtol=1e-5, atol=1e-5)
    np.testing.assert_allclose(np.asarray(action).sum(axis=1), np.ones(B),
                               rtol=1e-5, atol=1e-5)

    assert action.shape == (B, ACTION_DIM) and action.dtype == jnp.float32
    print("KERNEL_OK")
</pallas_src>

<mosaic_0001>
module attributes {stable_mosaic.version = 11 : i64} {
  func.func @kernel(%arg0: memref<8x16xf32, #tpu.memory_space<vmem>>, %arg1: memref<288x128xf32, #tpu.memory_space<vmem>>, %arg2: memref<8x4xf32, #tpu.memory_space<vmem>>) attributes {dimension_semantics = [], scalar_prefetch = 0 : i64, scratch_operands = 0 : i64, tpu.core_type = #tpu.core_type<tc>} {
    %c0 = arith.constant 0 : index
    %c0_0 = arith.constant 0 : index
    %0 = vector.load %arg0[%c0, %c0_0] : memref<8x16xf32, #tpu.memory_space<vmem>>, vector<8x16xf32>
    %c0_1 = arith.constant 0 : index
    %c0_2 = arith.constant 0 : index
    %1 = vector.load %arg1[%c0_1, %c0_2] : memref<288x128xf32, #tpu.memory_space<vmem>>, vector<1x16xf32>
    %c1 = arith.constant 1 : index
    %c0_3 = arith.constant 0 : index
    %2 = vector.load %arg1[%c1, %c0_3] : memref<288x128xf32, #tpu.memory_space<vmem>>, vector<1x16xf32>
    %c2 = arith.constant 2 : index
    %c0_4 = arith.constant 0 : index
    %3 = vector.load %arg1[%c2, %c0_4] : memref<288x128xf32, #tpu.memory_space<vmem>>, vector<1x128xf32>
    %c3 = arith.constant 3 : index
    %c0_5 = arith.constant 0 : index
    %4 = vector.load %arg1[%c3, %c0_5] : memref<288x128xf32, #tpu.memory_space<vmem>>, vector<1x128xf32>
    %c4 = arith.constant 4 : index
    %c0_6 = arith.constant 0 : index
    %5 = vector.load %arg1[%c4, %c0_6] : memref<288x128xf32, #tpu.memory_space<vmem>>, vector<1x128xf32>
    %c5 = arith.constant 5 : index
    %c0_7 = arith.constant 0 : index
    %6 = vector.load %arg1[%c5, %c0_7] : memref<288x128xf32, #tpu.memory_space<vmem>>, vector<1x128xf32>
    %c6 = arith.constant 6 : index
    %c0_8 = arith.constant 0 : index
    %7 = vector.load %arg1[%c6, %c0_8] : memref<288x128xf32, #tpu.memory_space<vmem>>, vector<1x128xf32>
    %c7 = arith.constant 7 : index
    %c0_9 = arith.constant 0 : index
    %8 = vector.load %arg1[%c7, %c0_9] : memref<288x128xf32, #tpu.memory_space<vmem>>, vector<1x128xf32>
    %c8 = arith.constant 8 : index
    %c0_10 = arith.constant 0 : index
    %9 = vector.load %arg1[%c8, %c0_10] : memref<288x128xf32, #tpu.memory_space<vmem>>, vector<1x4xf32>
    %c16 = arith.constant 16 : index
    %c0_11 = arith.constant 0 : index
    %10 = vector.load %arg1[%c16, %c0_11] : memref<288x128xf32, #tpu.memory_space<vmem>>, vector<16x128xf32>
    %c32 = arith.constant 32 : index
    %c0_12 = arith.constant 0 : index
    %11 = vector.load %arg1[%c32, %c0_12] : memref<288x128xf32, #tpu.memory_space<vmem>>, vector<128x128xf32>
    %c160 = arith.constant 160 : index
    %c0_13 = arith.constant 0 : index
    %12 = vector.load %arg1[%c160, %c0_13] : memref<288x128xf32, #tpu.memory_space<vmem>>, vector<128x128xf32>
    %cst = arith.constant dense<0.000000e+00> : vector<16xf32>
    %13 = vector.multi_reduction <add>, %0, %cst [0] : vector<8x16xf32> to vector<16xf32>
    %14 = vector.shape_cast %13 : vector<16xf32> to vector<1x16xf32>
    %cst_14 = arith.constant 8.000000e+00 : f32
    %15 = vector.broadcast %cst_14 : f32 to vector<1x16xf32>
    %16 = arith.divf %14, %15 : vector<1x16xf32>
    %17 = arith.mulf %0, %0 : vector<8x16xf32>
    %cst_15 = arith.constant dense<0.000000e+00> : vector<16xf32>
    %18 = vector.multi_reduction <add>, %17, %cst_15 [0] : vector<8x16xf32> to vector<16xf32>
    %19 = vector.shape_cast %18 : vector<16xf32> to vector<1x16xf32>
    %cst_16 = arith.constant 8.000000e+00 : f32
    %20 = vector.broadcast %cst_16 : f32 to vector<1x16xf32>
    %21 = arith.divf %19, %20 : vector<1x16xf32>
    %22 = arith.mulf %16, %16 : vector<1x16xf32>
    %23 = arith.subf %21, %22 : vector<1x16xf32>
    %cst_17 = arith.constant 0.000000e+00 : f32
    %24 = vector.broadcast %cst_17 : f32 to vector<1x16xf32>
    %25 = arith.maximumf %23, %24 : vector<1x16xf32>
    %26 = vector.broadcast %16 : vector<1x16xf32> to vector<8x16xf32>
    %27 = arith.subf %0, %26 : vector<8x16xf32>
    %cst_18 = arith.constant 9.99999974E-6 : f32
    %28 = vector.broadcast %cst_18 : f32 to vector<1x16xf32>
    %29 = arith.addf %25, %28 : vector<1x16xf32>
    %30 = math.rsqrt %29 : vector<1x16xf32>
    %31 = vector.broadcast %30 : vector<1x16xf32> to vector<8x16xf32>
    %32 = arith.mulf %27, %31 : vector<8x16xf32>
    %33 = vector.broadcast %1 : vector<1x16xf32> to vector<8x16xf32>
    %34 = arith.mulf %32, %33 : vector<8x16xf32>
    %35 = vector.broadcast %2 : vector<1x16xf32> to vector<8x16xf32>
    %36 = arith.addf %34, %35 : vector<8x16xf32>
    %cst_19 = arith.constant dense<0.000000e+00> : vector<8x128xf32>
    %37 = tpu.matmul %36, %10, %cst_19 {dimension_numbers = #tpu.dot_dimension_numbers<[1], [0], [0], [1], [0, 0, 1, 1], [], []>} : vector<8x16xf32>, vector<16x128xf32>, vector<8x128xf32> -> vector<8x128xf32>
    %38 = vector.broadcast %3 : vector<1x128xf32> to vector<8x128xf32>
    %39 = arith.addf %37, %38 : vector<8x128xf32>
    %cst_20 = arith.constant 0.000000e+00 : f32
    %40 = vector.broadcast %cst_20 : f32 to vector<8x128xf32>
    %41 = arith.maximumf %39, %40 : vector<8x128xf32>
    %cst_21 = arith.constant dense<0.000000e+00> : vector<128xf32>
    %42 = vector.multi_reduction <add>, %41, %cst_21 [0] : vector<8x128xf32> to vector<128xf32>
    %43 = vector.shape_cast %42 : vector<128xf32> to vector<1x128xf32>
    %cst_22 = arith.constant 8.000000e+00 : f32
    %44 = vector.broadcast %cst_22 : f32 to vector<1x128xf32>
    %45 = arith.divf %43, %44 : vector<1x128xf32>
    %46 = arith.mulf %41, %41 : vector<8x128xf32>
    %cst_23 = arith.constant dense<0.000000e+00> : vector<128xf32>
    %47 = vector.multi_reduction <add>, %46, %cst_23 [0] : vector<8x128xf32> to vector<128xf32>
    %48 = vector.shape_cast %47 : vector<128xf32> to vector<1x128xf32>
    %cst_24 = arith.constant 8.000000e+00 : f32
    %49 = vector.broadcast %cst_24 : f32 to vector<1x128xf32>
    %50 = arith.divf %48, %49 : vector<1x128xf32>
    %51 = arith.mulf %45, %45 : vector<1x128xf32>
    %52 = arith.subf %50, %51 : vector<1x128xf32>
    %cst_25 = arith.constant 0.000000e+00 : f32
    %53 = vector.broadcast %cst_25 : f32 to vector<1x128xf32>
    %54 = arith.maximumf %52, %53 : vector<1x128xf32>
    %55 = vector.broadcast %45 : vector<1x128xf32> to vector<8x128xf32>
    %56 = arith.subf %41, %55 : vector<8x128xf32>
    %cst_26 = arith.constant 9.99999974E-6 : f32
    %57 = vector.broadcast %cst_26 : f32 to vector<1x128xf32>
    %58 = arith.addf %54, %57 : vector<1x128xf32>
    %59 = math.rsqrt %58 : vector<1x128xf32>
    %60 = vector.broadcast %59 : vector<1x128xf32> to vector<8x128xf32>
    %61 = arith.mulf %56, %60 : vector<8x128xf32>
    %62 = vector.broadcast %4 : vector<1x128xf32> to vector<8x128xf32>
    %63 = arith.mulf %61, %62 : vector<8x128xf32>
    %64 = vector.broadcast %5 : vector<1x128xf32> to vector<8x128xf32>
    %65 = arith.addf %63, %64 : vector<8x128xf32>
    %cst_27 = arith.constant dense<0.000000e+00> : vector<8x128xf32>
    %66 = tpu.matmul %65, %11, %cst_27 {dimension_numbers = #tpu.dot_dimension_numbers<[1], [0], [0], [1], [0, 0, 1, 1], [], []>} : vector<8x128xf32>, vector<128x128xf32>, vector<8x128xf32> -> vector<8x128xf32>
    %67 = vector.broadcast %6 : vector<1x128xf32> to vector<8x128xf32>
    %68 = arith.addf %66, %67 : vector<8x128xf32>
    %cst_28 = arith.constant 0.000000e+00 : f32
    %69 = vector.broadcast %cst_28 : f32 to vector<8x128xf32>
    %70 = arith.maximumf %68, %69 : vector<8x128xf32>
    %cst_29 = arith.constant dense<0.000000e+00> : vector<128xf32>
    %71 = vector.multi_reduction <add>, %70, %cst_29 [0] : vector<8x128xf32> to vector<128xf32>
    %72 = vector.shape_cast %71 : vector<128xf32> to vector<1x128xf32>
    %cst_30 = arith.constant 8.000000e+00 : f32
    %73 = vector.broadcast %cst_30 : f32 to vector<1x128xf32>
    %74 = arith.divf %72, %73 : vector<1x128xf32>
    %75 = arith.mulf %70, %70 : vector<8x128xf32>
    %cst_31 = arith.constant dense<0.000000e+00> : vector<128xf32>
    %76 = vector.multi_reduction <add>, %75, %cst_31 [0] : vector<8x128xf32> to vector<128xf32>
    %77 = vector.shape_cast %76 : vector<128xf32> to vector<1x128xf32>
    %cst_32 = arith.constant 8.000000e+00 : f32
    %78 = vector.broadcast %cst_32 : f32 to vector<1x128xf32>
    %79 = arith.divf %77, %78 : vector<1x128xf32>
    %80 = arith.mulf %74, %74 : vector<1x128xf32>
    %81 = arith.subf %79, %80 : vector<1x128xf32>
    %cst_33 = arith.constant 0.000000e+00 : f32
    %82 = vector.broadcast %cst_33 : f32 to vector<1x128xf32>
    %83 = arith.maximumf %81, %82 : vector<1x128xf32>
    %84 = vector.broadcast %74 : vector<1x128xf32> to vector<8x128xf32>
    %85 = arith.subf %70, %84 : vector<8x128xf32>
    %cst_34 = arith.constant 9.99999974E-6 : f32
    %86 = vector.broadcast %cst_34 : f32 to vector<1x128xf32>
    %87 = arith.addf %83, %86 : vector<1x128xf32>
    %88 = math.rsqrt %87 : vector<1x128xf32>
    %89 = vector.broadcast %88 : vector<1x128xf32> to vector<8x128xf32>
    %90 = arith.mulf %85, %89 : vector<8x128xf32>
    %91 = vector.broadcast %7 : vector<1x128xf32> to vector<8x128xf32>
    %92 = arith.mulf %90, %91 : vector<8x128xf32>
    %93 = vector.broadcast %8 : vector<1x128xf32> to vector<8x128xf32>
    %94 = arith.addf %92, %93 : vector<8x128xf32>
    %cst_35 = arith.constant dense<0.000000e+00> : vector<8x128xf32>
    %95 = tpu.matmul %94, %12, %cst_35 {dimension_numbers = #tpu.dot_dimension_numbers<[1], [0], [0], [1], [0, 0, 1, 1], [], []>} : vector<8x128xf32>, vector<128x128xf32>, vector<8x128xf32> -> vector<8x128xf32>
    %96 = vector.extract_strided_slice %95 {offsets = [0, 0], sizes = [8, 4], strides = [1, 1]} : vector<8x128xf32> to vector<8x4xf32>
    %97 = vector.broadcast %9 : vector<1x4xf32> to vector<8x4xf32>
    %98 = arith.addf %96, %97 : vector<8x4xf32>
    %cst_36 = arith.constant dense<0xFF800000> : vector<8xf32>
    %99 = vector.multi_reduction <maximumf>, %98, %cst_36 [1] : vector<8x4xf32> to vector<8xf32>
    %100 = vector.shape_cast %99 : vector<8xf32> to vector<8x1xf32>
    %101 = vector.broadcast %100 : vector<8x1xf32> to vector<8x4xf32>
    %102 = arith.subf %98, %101 : vector<8x4xf32>
    %103 = math.exp %102 : vector<8x4xf32>
    %cst_37 = arith.constant dense<0.000000e+00> : vector<8xf32>
    %104 = vector.multi_reduction <add>, %103, %cst_37 [1] : vector<8x4xf32> to vector<8xf32>
    %105 = vector.shape_cast %104 : vector<8xf32> to vector<8x1xf32>
    %106 = tpu.reciprocal %105 : vector<8x1xf32> -> vector<8x1xf32>
    %107 = vector.broadcast %106 : vector<8x1xf32> to vector<8x4xf32>
    %108 = arith.mulf %103, %107 : vector<8x4xf32>
    %c0_38 = arith.constant 0 : index
    %c0_39 = arith.constant 0 : index
    %109 = vector.load %arg2[%c0_38, %c0_39] : memref<8x4xf32, #tpu.memory_space<vmem>>, vector<8x4xf32>
    tpu.vector_store %arg2[%c0_38, %c0_39], %108 {strides = array<i32>} : memref<8x4xf32, #tpu.memory_space<vmem>>, vector<8x4xf32>,
    return
  }
}

</mosaic_0001>

<llo_original>
// kernel: tpu_custom_call.1
$region0: #{tpu_custom_call.1}
  #allocation0 [shape = 'u32[]', space=smem, size = 0x4, offset = 0x4, fixed_abs, tag = 'smem constant byte address 0x4 - core index']
  #allocation1 [shape = 'u32[144,128]{1,0:T(1,128)}', space=vmem, size = 0x12000, scoped, tag = 'internal scratch']
  %s0 = inlined_call_operand.hbm [shape: f32[8,16], index: 0, kind: input, shape index: {}]
  %s1 = inlined_call_operand.hbm [shape: f32[288,128], index: 1, kind: input, shape index: {}]
  %s2 = inlined_call_operand.vmem [shape: f32[8,4], index: 2, kind: output, shape index: {}]
  %s3 = sld [smem:[#allocation0]]
  $region26: #{tpu_custom_call.1} parent=0
    _
  %s5 = ssub.s32 1, %s3
  %s6 = scalar_select 0, %s5, %s3
  $region1: #{tpu_custom_call.1} parent=0
    #allocation2 [shape = 'u8[4096]{0}', space=vmem, size = 0x1000, scoped, tag = 'input window, operand 0, single buffered']
    #allocation3 [shape = 's32[1]{0}', space=sflag, size = 0x4, scoped, tag = 'scoped memory for tpu_custom_call.1']
    #allocation4 [shape = 'u8[147456]{0}', space=vmem, size = 0x24000, scoped, tag = 'input window, operand 1, single buffered']
    #allocation5 [shape = 's32[1]{0}', space=sflag, size = 0x4, scoped, tag = 'scoped memory for tpu_custom_call.1']
    %7 = vsyncpa [#allocation3], 0
    %8 = vsyncpa [#allocation5], 0
    // Predicated region
    $region2: #{tpu_custom_call.1} parent=1 // pred_check
      _
    $region3: #{tpu_custom_call.1} parent=1 // pred_check_branch
      %10 = sbr.rel (0) target = $region5
    $region4: #{tpu_custom_call.1} parent=1 // pred_region
      %s12 = ssub.s32 128, 128
      %13 = vsyncadd [#allocation3], %s12
      %s15 = sshll.u32 [#allocation2], 4
      %s16 = int_to_ptr.vmem [resolvable:$true] %s15
      %18 = dma.hbm_to_vmem [thread:$0]  %s0, 128, %s16, [#allocation3]
    $region5: #{tpu_custom_call.1} parent=1 // pred_fallthru
      _
    // Predicated region
    $region6: #{tpu_custom_call.1} parent=1 // pred_check
      _
    $region7: #{tpu_custom_call.1} parent=1 // pred_check_branch
      %20 = sbr.rel (0) target = $region9
    $region8: #{tpu_custom_call.1} parent=1 // pred_region
      %s22 = ssub.s32 4608, 4608
      %23 = vsyncadd [#allocation5], %s22
      %s24 = sshll.u32 [#allocation4], 4
      %s25 = int_to_ptr.vmem [resolvable:$true] %s24
      %30 = dma.hbm_to_vmem [thread:$0]  %s1, 4608, %s25, [#allocation5], 128, 128, 8
    $region9: #{tpu_custom_call.1} parent=1 // pred_fallthru
      _
    // Predicated region
    $region10: #{tpu_custom_call.1} parent=1 // pred_check
      _
    $region11: #{tpu_custom_call.1} parent=1 // pred_check_branch
      %32 = sbr.rel (0) target = $region13
    $region12: #{tpu_custom_call.1} parent=1 // pred_region
      %33 = dma.done [#allocation3], 128
    $region13: #{tpu_custom_call.1} parent=1 // pred_fallthru
      _
    // Predicated region
    $region14: #{tpu_custom_call.1} parent=1 // pred_check
      _
    $region15: #{tpu_custom_call.1} parent=1 // pred_check_branch
      %35 = sbr.rel (0) target = $region17
    $region16: #{tpu_custom_call.1} parent=1 // pred_region
      %36 = dma.done [#allocation5], 4608
    $region17: #{tpu_custom_call.1} parent=1 // pred_fallthru
      _
    %v37 = vld [vmem:[#allocation2] sm:$0xff]
    %v38 = vld [vmem:[#allocation4] sm:$0x1]
    %v39 = vld [vmem:[#allocation4 + $0x1] sm:$0x1]
    %v40 = vld [vmem:[#allocation4 + $0x2] sm:$0x1]
    %v41 = vld [vmem:[#allocation4 + $0x3] sm:$0x1]
    %v42 = vld [vmem:[#allocation4 + $0x4] sm:$0x1]
    %v43 = vld [vmem:[#allocation4 + $0x5] sm:$0x1]
    %v44 = vld [vmem:[#allocation4 + $0x6] sm:$0x1]
    %v45 = vld [vmem:[#allocation4 + $0x7] sm:$0x1]
    %v46 = vld [vmem:[#allocation4 + $0x8] sm:$0x1]
    %v47 = vld [vmem:[#allocation4 + $0x10] sm:$0xff]
    %v48 = vld [vmem:[#allocation4 + $0x18] sm:$0xff]
    %v49 = vld [vmem:[#allocation4 + $0x20] sm:$0xff]
    %v50 = vld [vmem:[#allocation4 + $0x28] sm:$0xff]
    %v51 = vld [vmem:[#allocation4 + $0x30] sm:$0xff]
    %v52 = vld [vmem:[#allocation4 + $0x38] sm:$0xff]
    %v53 = vld [vmem:[#allocation4 + $0x40] sm:$0xff]
    %v54 = vld [vmem:[#allocation4 + $0x48] sm:$0xff]
    %v55 = vld [vmem:[#allocation4 + $0x50] sm:$0xff]
    %v56 = vld [vmem:[#allocation4 + $0x58] sm:$0xff]
    %v57 = vld [vmem:[#allocation4 + $0x60] sm:$0xff]
    %v58 = vld [vmem:[#allocation4 + $0x68] sm:$0xff]
    %v59 = vld [vmem:[#allocation4 + $0x70] sm:$0xff]
    %v60 = vld [vmem:[#allocation4 + $0x78] sm:$0xff]
    %v61 = vld [vmem:[#allocation4 + $0x80] sm:$0xff]
    %v62 = vld [vmem:[#allocation4 + $0x88] sm:$0xff]
    %v63 = vld [vmem:[#allocation4 + $0x90] sm:$0xff]
    %v64 = vld [vmem:[#allocation4 + $0x98] sm:$0xff]
    %v65 = vld [vmem:[#allocation4 + $0xa0] sm:$0xff]
    %v66 = vld [vmem:[#allocation4 + $0xa8] sm:$0xff]
    %v67 = vld [vmem:[#allocation4 + $0xb0] sm:$0xff]
    %v68 = vld [vmem:[#allocation4 + $0xb8] sm:$0xff]
    %v69 = vld [vmem:[#allocation4 + $0xc0] sm:$0xff]
    %v70 = vld [vmem:[#allocation4 + $0xc8] sm:$0xff]
    %v71 = vld [vmem:[#allocation4 + $0xd0] sm:$0xff]
    %v72 = vld [vmem:[#allocation4 + $0xd8] sm:$0xff]
    %v73 = vld [vmem:[#allocation4 + $0xe0] sm:$0xff]
    %v74 = vld [vmem:[#allocation4 + $0xe8] sm:$0xff]
    %v75 = vld [vmem:[#allocation4 + $0xf0] sm:$0xff]
    %v76 = vld [vmem:[#allocation4 + $0xf8] sm:$0xff]
    %v77 = vld [vmem:[#allocation4 + $0x100] sm:$0xff]
    %v78 = vld [vmem:[#allocation4 + $0x108] sm:$0xff]
    %v79 = vld [vmem:[#allocation4 + $0x110] sm:$0xff]
    %v80 = vld [vmem:[#allocation4 + $0x118] sm:$0xff]
    %vm81 = vcmask 130048
    %v82 = vsel %vm81, %v37, 0.0
    %v83 = vrot.slane %v82, 4
    %v84 = vadd.f32 %v82, %v83
    %v85 = vrot.slane %v84, 2
    %v86 = vadd.f32 %v84, %v85
    %v87 = vrot.slane %v86, 1
    %v88 = vadd.f32 %v86, %v87
    %v89 = vrcp.pop 8.0
    %v90 = vmul.f32 %v88, %v89
    %v91 = vmul.f32 %v37, %v37
    %v92 = vsel %vm81, %v91, 0.0
    %v93 = vrot.slane %v92, 4
    %v94 = vadd.f32 %v92, %v93
    %v95 = vrot.slane %v94, 2
    %v96 = vadd.f32 %v94, %v95
    %v97 = vrot.slane %v96, 1
    %v98 = vadd.f32 %v96, %v97
    %v99 = vmul.f32 %v98, %v89
    %v100 = vmul.f32 %v90, %v90
    %v101 = vsub.f32 %v99, %v100
    %v102 = vmax.f32 %v101, 0.0
    %v103 = vsub.f32 %v37, %v90
    %v104 = vadd.f32 %v102, 1e-05
    %v105 = vrsqrt.pop %v104
    %v106 = vmul.f32 %v103, %v105
    %v107 = vlaneseq
    %v108 = vshrl.u32 %v107, 7
    %v109 = vsub.s32 0, %v108
    %v110 = vrot.slane %v38, %v109
    %v111 = vmul.f32 %v106, %v110
    %v112 = vlaneseq
    %v113 = vshrl.u32 %v112, 7
    %v114 = vsub.s32 0, %v113
    %v115 = vrot.slane %v39, %v114
    %v116 = vadd.f32 %v111, %v115
    %v117 = vlaneseq
    %v118 = vshrl.u32 %v117, 7
    %v119 = vsub.s32 0, %v118
    %v120 = vrot.slane %v40, %v119
    %v122 = vsel %vm81, %v116, 0
    %124 = vmatprep.subr.mxu0 0.0
    %125 = vmatpush1.msra.mxu0 %v47
    %126 = vmatprep.subr.mxu0 0.0
    %127 = vmatpush1.msra.mxu0 %v48
    %128 = vmatprep.subr.mxu0 0.0
    %129 = vmatpush1.msra.mxu0 0.0
    %130 = vmatprep.subr.mxu0 0.0
    %131 = vmatpush1.msra.mxu0 0.0
    %132 = vmatprep.subr.mxu0 0.0
    %133 = vmatpush1.msra.mxu0 0.0
    %134 = vmatprep.subr.mxu0 0.0
    %135 = vmatpush1.msra.mxu0 0.0
    %136 = vmatprep.subr.mxu0 0.0
    %137 = vmatpush1.msra.mxu0 0.0
    %138 = vmatprep.subr.mxu0 0.0
    %139 = vmatpush1.msra.mxu0 0.0
    %140 = vmatprep.subr.mxu0 0.0
    %141 = vmatpush1.msra.mxu0 0.0
    %142 = vmatprep.subr.mxu0 0.0
    %143 = vmatpush1.msra.mxu0 0.0
    %144 = vmatprep.subr.mxu0 0.0
    %145 = vmatpush1.msra.mxu0 0.0
    %146 = vmatprep.subr.mxu0 0.0
    %147 = vmatpush1.msra.mxu0 0.0
    %148 = vmatprep.subr.mxu0 0.0
    %149 = vmatpush1.msra.mxu0 0.0
    %150 = vmatprep.subr.mxu0 0.0
    %151 = vmatpush1.msra.mxu0 0.0
    %152 = vmatprep.subr.mxu0 0.0
    %153 = vmatpush1.msra.mxu0 0.0
    %154 = vmatprep.subr.mxu0 0.0
    %155 = vmatpush1.msra.mxu0 0.0
    %156 = vmatprep.subr.mxu0 0.0
    %157 = vmatpush1.msra.mxu0 0.0
    %158 = vmatprep.subr.mxu0 0.0
    %159 = vmatpush1.msra.mxu0 0.0
    %160 = vmatprep.subr.mxu0 0.0
    %161 = vmatpush1.msra.mxu0 0.0
    %162 = vmatprep.subr.mxu0 0.0
    %163 = vmatpush1.msra.mxu0 0.0
    %164 = vmatprep.subr.mxu0 0.0
    %165 = vmatpush1.msra.mxu0 0.0
    %166 = vmatprep.subr.mxu0 0.0
    %167 = vmatpush1.msra.mxu0 0.0
    %168 = vmatprep.subr.mxu0 0.0
    %169 = vmatpush1.msra.mxu0 0.0
    %170 = vmatprep.subr.mxu0 0.0
    %171 = vmatpush1.msra.mxu0 0.0
    %172 = vmatprep.subr.mxu0 0.0
    %173 = vmatpush1.msra.mxu0 0.0
    %174 = vmatprep.subr.mxu0 0.0
    %175 = vmatpush1.msra.mxu0 0.0
    %176 = vmatprep.subr.mxu0 0.0
    %177 = vmatpush1.msra.mxu0 0.0
    %178 = vmatprep.subr.mxu0 0.0
    %179 = vmatpush1.msra.mxu0 0.0
    %180 = vmatprep.subr.mxu0 0.0
    %181 = vmatpush1.msra.mxu0 0.0
    %182 = vmatprep.subr.mxu0 0.0
    %183 = vmatpush1.msra.mxu0 0.0
    %184 = vmatprep.subr.mxu0 0.0
    %185 = vmatpush1.msra.mxu0 0.0
    %186 = vmatprep.subr.mxu0 0.0
    %187 = vmatpush1.msra.mxu0 0.0
    %188 = vmatprep.mubr.f32.mxu0 0.0
    %189 = vmatmul.mubr.f32.gmra.mrb[0].mxu0 %v122
    %v190 = vpop.f32.mrb[0].mxu0
    %v191 = vadd.f32 %v120, %v190
    %v192 = vpop.f32.mrb[0].mxu0
    %193 = vdwg.mxu0
    %v194 = vmax.f32 %v191, 0.0
    %v195 = vrot.slane %v194, 4
    %v196 = vadd.f32 %v194, %v195
    %v197 = vrot.slane %v196, 2
    %v198 = vadd.f32 %v196, %v197
    %v199 = vrot.slane %v198, 1
    %v200 = vadd.f32 %v198, %v199
    %v201 = vmul.f32 %v200, %v89
    %v202 = vmul.f32 %v194, %v194
    %v203 = vrot.slane %v202, 4
    %v204 = vadd.f32 %v202, %v203
    %v205 = vrot.slane %v204, 2
    %v206 = vadd.f32 %v204, %v205
    %v207 = vrot.slane %v206, 1
    %v208 = vadd.f32 %v206, %v207
    %v209 = vmul.f32 %v208, %v89
    %v210 = vmul.f32 %v201, %v201
    %v211 = vsub.f32 %v209, %v210
    %v212 = vmax.f32 %v211, 0.0
    %v213 = vsub.f32 %v194, %v201
    %v214 = vadd.f32 %v212, 1e-05
    %v215 = vrsqrt.pop %v214
    %v216 = vmul.f32 %v213, %v215
    %v217 = vlaneseq
    %v218 = vshrl.u32 %v217, 7
    %v219 = vsub.s32 0, %v218
    %v220 = vrot.slane %v41, %v219
    %v221 = vmul.f32 %v216, %v220
    %v222 = vlaneseq
    %v223 = vshrl.u32 %v222, 7
    %v224 = vsub.s32 0, %v223
    %v225 = vrot.slane %v42, %v224
    %v226 = vadd.f32 %v221, %v225
    %v227 = vlaneseq
    %v228 = vshrl.u32 %v227, 7
    %v229 = vsub.s32 0, %v228
    %v230 = vrot.slane %v43, %v229
    %231 = vmatprep.subr.mxu0 0.0
    %232 = vmatpush1.msra.mxu0 %v49
    %233 = vmatprep.subr.mxu0 0.0
    %234 = vmatpush1.msra.mxu0 %v50
    %235 = vmatprep.subr.mxu0 0.0
    %236 = vmatpush1.msra.mxu0 %v51
    %237 = vmatprep.subr.mxu0 0.0
    %238 = vmatpush1.msra.mxu0 %v52
    %239 = vmatprep.subr.mxu0 0.0
    %240 = vmatpush1.msra.mxu0 %v53
    %241 = vmatprep.subr.mxu0 0.0
    %242 = vmatpush1.msra.mxu0 %v54
    %243 = vmatprep.subr.mxu0 0.0
    %244 = vmatpush1.msra.mxu0 %v55
    %245 = vmatprep.subr.mxu0 0.0
    %246 = vmatpush1.msra.mxu0 %v56
    %247 = vmatprep.subr.mxu0 0.0
    %248 = vmatpush1.msra.mxu0 %v57
    %249 = vmatprep.subr.mxu0 0.0
    %250 = vmatpush1.msra.mxu0 %v58
    %251 = vmatprep.subr.mxu0 0.0
    %252 = vmatpush1.msra.mxu0 %v59
    %253 = vmatprep.subr.mxu0 0.0
    %254 = vmatpush1.msra.mxu0 %v60
    %255 = vmatprep.subr.mxu0 0.0
    %256 = vmatpush1.msra.mxu0 %v61
    %257 = vmatprep.subr.mxu0 0.0
    %258 = vmatpush1.msra.mxu0 %v62
    %259 = vmatprep.subr.mxu0 0.0
    %260 = vmatpush1.msra.mxu0 %v63
    %261 = vmatprep.subr.mxu0 0.0
    %262 = vmatpush1.msra.mxu0 %v64
    %263 = vmatprep.subr.mxu0 0.0
    %264 = vmatpush1.msra.mxu0 0.0
    %265 = vmatprep.subr.mxu0 0.0
    %266 = vmatpush1.msra.mxu0 0.0
    %267 = vmatprep.subr.mxu0 0.0
    %268 = vmatpush1.msra.mxu0 0.0
    %269 = vmatprep.subr.mxu0 0.0
    %270 = vmatpush1.msra.mxu0 0.0
    %271 = vmatprep.subr.mxu0 0.0
    %272 = vmatpush1.msra.mxu0 0.0
    %273 = vmatprep.subr.mxu0 0.0
    %274 = vmatpush1.msra.mxu0 0.0
    %275 = vmatprep.subr.mxu0 0.0
    %276 = vmatpush1.msra.mxu0 0.0
    %277 = vmatprep.subr.mxu0 0.0
    %278 = vmatpush1.msra.mxu0 0.0
    %279 = vmatprep.subr.mxu0 0.0
    %280 = vmatpush1.msra.mxu0 0.0
    %281 = vmatprep.subr.mxu0 0.0
    %282 = vmatpush1.msra.mxu0 0.0
    %283 = vmatprep.subr.mxu0 0.0
    %284 = vmatpush1.msra.mxu0 0.0
    %285 = vmatprep.subr.mxu0 0.0
    %286 = vmatpush1.msra.mxu0 0.0
    %287 = vmatprep.subr.mxu0 0.0
    %288 = vmatpush1.msra.mxu0 0.0
    %289 = vmatprep.subr.mxu0 0.0
    %290 = vmatpush1.msra.mxu0 0.0
    %291 = vmatprep.subr.mxu0 0.0
    %292 = vmatpush1.msra.mxu0 0.0
    %293 = vmatprep.subr.mxu0 0.0
    %294 = vmatpush1.msra.mxu0 0.0
    %295 = vmatprep.mubr.f32.mxu0 0.0
    %296 = vmatmul.mubr.f32.gmra.mrb[0].mxu0 %v226
    %v297 = vpop.f32.mrb[0].mxu0
    %v298 = vadd.f32 %v230, %v297
    %v299 = vpop.f32.mrb[0].mxu0
    %300 = vdwg.mxu0
    %v301 = vmax.f32 %v298, 0.0
    %v302 = vrot.slane %v301, 4
    %v303 = vadd.f32 %v301, %v302
    %v304 = vrot.slane %v303, 2
    %v305 = vadd.f32 %v303, %v304
    %v306 = vrot.slane %v305, 1
    %v307 = vadd.f32 %v305, %v306
    %v308 = vmul.f32 %v307, %v89
    %v309 = vmul.f32 %v301, %v301
    %v310 = vrot.slane %v309, 4
    %v311 = vadd.f32 %v309, %v310
    %v312 = vrot.slane %v311, 2
    %v313 = vadd.f32 %v311, %v312
    %v314 = vrot.slane %v313, 1
    %v315 = vadd.f32 %v313, %v314
    %v316 = vmul.f32 %v315, %v89
    %v317 = vmul.f32 %v308, %v308
    %v318 = vsub.f32 %v316, %v317
    %v319 = vmax.f32 %v318, 0.0
    %v320 = vsub.f32 %v301, %v308
    %v321 = vadd.f32 %v319, 1e-05
    %v322 = vrsqrt.pop %v321
    %v323 = vmul.f32 %v320, %v322
    %v324 = vlaneseq
    %v325 = vshrl.u32 %v324, 7
    %v326 = vsub.s32 0, %v325
    %v327 = vrot.slane %v44, %v326
    %v328 = vmul.f32 %v323, %v327
    %v329 = vlaneseq
    %v330 = vshrl.u32 %v329, 7
    %v331 = vsub.s32 0, %v330
    %v332 = vrot.slane %v45, %v331
    %v333 = vadd.f32 %v328, %v332
    %334 = vmatprep.subr.mxu0 0.0
    %335 = vmatpush1.msra.mxu0 %v65
    %336 = vmatprep.subr.mxu0 0.0
    %337 = vmatpush1.msra.mxu0 %v66
    %338 = vmatprep.subr.mxu0 0.0
    %339 = vmatpush1.msra.mxu0 %v67
    %340 = vmatprep.subr.mxu0 0.0
    %341 = vmatpush1.msra.mxu0 %v68
    %342 = vmatprep.subr.mxu0 0.0
    %343 = vmatpush1.msra.mxu0 %v69
    %344 = vmatprep.subr.mxu0 0.0
    %345 = vmatpush1.msra.mxu0 %v70
    %346 = vmatprep.subr.mxu0 0.0
    %347 = vmatpush1.msra.mxu0 %v71
    %348 = vmatprep.subr.mxu0 0.0
    %349 = vmatpush1.msra.mxu0 %v72
    %350 = vmatprep.subr.mxu0 0.0
    %351 = vmatpush1.msra.mxu0 %v73
    %352 = vmatprep.subr.mxu0 0.0
    %353 = vmatpush1.msra.mxu0 %v74
    %354 = vmatprep.subr.mxu0 0.0
    %355 = vmatpush1.msra.mxu0 %v75
    %356 = vmatprep.subr.mxu0 0.0
    %357 = vmatpush1.msra.mxu0 %v76
    %358 = vmatprep.subr.mxu0 0.0
    %359 = vmatpush1.msra.mxu0 %v77
    %360 = vmatprep.subr.mxu0 0.0
    %361 = vmatpush1.msra.mxu0 %v78
    %362 = vmatprep.subr.mxu0 0.0
    %363 = vmatpush1.msra.mxu0 %v79
    %364 = vmatprep.subr.mxu0 0.0
    %365 = vmatpush1.msra.mxu0 %v80
    %366 = vmatprep.subr.mxu0 0.0
    %367 = vmatpush1.msra.mxu0 0.0
    %368 = vmatprep.subr.mxu0 0.0
    %369 = vmatpush1.msra.mxu0 0.0
    %370 = vmatprep.subr.mxu0 0.0
    %371 = vmatpush1.msra.mxu0 0.0
    %372 = vmatprep.subr.mxu0 0.0
    %373 = vmatpush1.msra.mxu0 0.0
    %374 = vmatprep.subr.mxu0 0.0
    %375 = vmatpush1.msra.mxu0 0.0
    %376 = vmatprep.subr.mxu0 0.0
    %377 = vmatpush1.msra.mxu0 0.0
    %378 = vmatprep.subr.mxu0 0.0
    %379 = vmatpush1.msra.mxu0 0.0
    %380 = vmatprep.subr.mxu0 0.0
    %381 = vmatpush1.msra.mxu0 0.0
    %382 = vmatprep.subr.mxu0 0.0
    %383 = vmatpush1.msra.mxu0 0.0
    %384 = vmatprep.subr.mxu0 0.0
    %385 = vmatpush1.msra.mxu0 0.0
    %386 = vmatprep.subr.mxu0 0.0
    %387 = vmatpush1.msra.mxu0 0.0
    %388 = vmatprep.subr.mxu0 0.0
    %389 = vmatpush1.msra.mxu0 0.0
    %390 = vmatprep.subr.mxu0 0.0
    %391 = vmatpush1.msra.mxu0 0.0
    %392 = vmatprep.subr.mxu0 0.0
    %393 = vmatpush1.msra.mxu0 0.0
    %394 = vmatprep.subr.mxu0 0.0
    %395 = vmatpush1.msra.mxu0 0.0
    %396 = vmatprep.subr.mxu0 0.0
    %397 = vmatpush1.msra.mxu0 0.0
    %398 = vmatprep.mubr.f32.mxu0 0.0
    %399 = vmatmul.mubr.f32.gmra.mrb[0].mxu0 %v333
    %v400 = vpop.f32.mrb[0].mxu0
    %v401 = vadd.f32 0.0, %v400
    %v402 = vpop.f32.mrb[0].mxu0
    %403 = vdwg.mxu0
    %v404 = vlaneseq
    %v405 = vshrl.u32 %v404, 7
    %v406 = vsub.s32 0, %v405
    %v407 = vrot.slane %v46, %v406
    %v408 = vadd.f32 %v401, %v407
    %vm409 = vcmask 31744
    %v410 = vsel %vm409, %v408, -inf
    %411 = vmax.xlane.f32.xlu0 %v410
    %v412 = vpop.xlane.xlu0 %411
    %v413 = vsub.f32 %v408, %v412
    %v414 = vmul.f32 %v413, 1.442695
    %v415 = vpow.pop %v414
    %v416 = vsel %vm409, %v415, 0.0
    %417 = vadd.xlane.f32.xlu0 %v416
    %v418 = vpop.xlane.xlu0 %417
    %v419 = vrcp.pop %v418
    %v420 = vmul.f32 %v415, %v419
    %421 = vst.msk [vmem:[%s2] sm:$0xff] %vm409, %v420
    // Predicated region
    $region18: #{tpu_custom_call.1} parent=1 // pred_check
      _
    $region19: #{tpu_custom_call.1} parent=1 // pred_check_branch
      %423 = sbr.rel (0) target = $region21
    $region20: #{tpu_custom_call.1} parent=1 // pred_region
      _
    $region21: #{tpu_custom_call.1} parent=1 // pred_fallthru
      _
    // Predicated region
    $region22: #{tpu_custom_call.1} parent=1 // pred_check
      _
    $region23: #{tpu_custom_call.1} parent=1 // pred_check_branch
      %425 = sbr.rel (0) target = $region25
    $region24: #{tpu_custom_call.1} parent=1 // pred_region
      _
    $region25: #{tpu_custom_call.1} parent=1 // pred_fallthru
      _
    %426 = vsyncpa [#allocation3], 1
    %427 = vsyncpa [#allocation5], 1

</llo_original>
